<compile_context>
chip_gen: v5e
topology: v5e:2x2
jax: 0.10.0
libtpu: 0.0.40
codegen_flags: <defaults>
</compile_context>

<pallas_src>
import jax
import jax.numpy as jnp
from jax.experimental import pallas as pl
from jax.experimental.pallas import tpu as pltpu


def _vmem_capacity_bytes():
    try:
        return int(pltpu.get_tpu_info().vmem_capacity_bytes)
    except Exception:
        return 64 << 20          # conservative (v7x-sized) fallback


def _choose_tk(hw, itemsize, per_buffer_budget, max_tk=None):
    """Row-tile height for A: the full HW if it fits, else a multiple of 128."""
    max_rows = per_buffer_budget // max(1, hw * itemsize)
    if max_tk is not None:
        max_rows = min(max_rows, max_tk)
    if hw <= 128 or max_rows >= hw:
        return hw                                   # single full-extent tile
    tk = max(128, (max_rows // 128) * 128)
    if hw % 128 == 0:                               # prefer an even split (no ragged tail)
        while tk > 128 and hw % tk != 0:
            tk -= 128
    return tk


def _a_block_spec(tk, hw, nk_inner, n_buffers):
    index_map = lambda s, b, k: (b, s * nk_inner + k, 0)
    if n_buffers > 2:
        try:
            return pl.BlockSpec((1, tk, hw), index_map,
                                pipeline_mode=pl.Buffered(n_buffers))
        except TypeError:        # older jax without pipeline_mode kwarg
            pass
    return pl.BlockSpec((1, tk, hw), index_map)


def _make_kernel(c, hw, hw_v, tk, nk_inner, n_splits, a_dtype, precision):
    nk_total = nk_inner * n_splits
    tail = hw_v != hw                     # last global row tile is partial; V is zero-padded
    cast_lhs = jnp.dtype(a_dtype) != jnp.dtype(jnp.float32)

    def kernel(v_ref, a_ref, e_ref, s_ref, acc_ref):
        split = pl.program_id(0)
        k = pl.program_id(2)
        gk = split * nk_inner + k          # global row-tile index into A

        @pl.when(k == 0)
        def _init():
            acc_ref[...] = jnp.zeros_like(acc_ref)
            s_ref[...] = jnp.zeros_like(s_ref)

        # Sparsity term: computed once per batch, carried by split 0 only.
        @pl.when((k == 0) & (split == 0))
        def _sparsity():
            v = v_ref[0]                                         # (C, HW_v)
            sval = v ** 0.9 + (1.0 - v) ** 0.9
            if tail:                                             # mask zero-padded V lanes
                col = jax.lax.broadcasted_iota(jnp.int32, sval.shape, 1)
                sval = jnp.where(col < hw, sval, 0.0)
            s_ref[...] = jnp.broadcast_to(jnp.sum(sval, keepdims=True), s_ref.shape)

        # Accumulate this contiguous A row-tile's contribution to V @ A (C, HW).
        a = a_ref[0]                                             # (TK, HW)
        if tail:
            # Boundary-block rows past HW hold unspecified data; an explicit
            # select (not 0 * x) keeps NaN/Inf garbage out of the accumulator.
            row = jax.lax.broadcasted_iota(jnp.int32, a.shape, 0)
            a = jnp.where(row < hw - gk * tk, a, jnp.zeros_like(a))
        if nk_total == 1:
            lhs = v_ref[0]                                       # (C, TK == HW_v)
        else:
            off = pl.multiple_of(gk * tk, 128)                   # tk is a multiple of 128 here
            lhs = v_ref[0, :, pl.ds(off, tk)]                    # (C, TK)
        if cast_lhs:
            lhs = lhs.astype(a_dtype)
        acc_ref[...] += jnp.dot(lhs, a, preferred_element_type=jnp.float32,
                                precision=precision)

        # Epilogue: per-channel partial diag for this split (abs + mean happen
        # in the wrapper, on the split-summed full diagonal).
        @pl.when(k == nk_inner - 1)
        def _finalize():
            vq = v_ref[0, :, :hw] if tail else v_ref[0]          # (C, HW)
            diag = jnp.sum(acc_ref[...] * vq, axis=-1, keepdims=True)   # (C, 1)
            e_ref[...] = jnp.broadcast_to(diag.reshape(1, 1, c, 1), e_ref.shape)

    return kernel


def our_loss(eigen_vectors, affinity_matrix, *, max_tk=None, precision=None):
    """eigen_vectors: [N, C, H, W] float; affinity_matrix: [N, H*W, H*W] (f32 or bf16)."""
    n, c, h, w = eigen_vectors.shape
    hw = h * w
    assert affinity_matrix.shape == (n, hw, hw), affinity_matrix.shape

    v_flat = eigen_vectors.reshape(n, c, hw).astype(jnp.float32)
    a = affinity_matrix            # streamed in native dtype, never copied or padded

    a_itemsize = jnp.dtype(a.dtype).itemsize
    vmem_cap = _vmem_capacity_bytes()
    small_vmem = vmem_cap <= (64 << 20)              # v7x-class parts
    per_buffer_budget = (8 << 20) if small_vmem else (20 << 20)
    vmem_ceiling = (48 << 20) if small_vmem else (96 << 20)

    tk = _choose_tk(hw, a_itemsize, per_buffer_budget, max_tk)
    nk = (hw + tk - 1) // tk

    # Leading "parallel" split of A's row range: keeps the second v7x
    # TensorCore busy when the batch axis alone can't (N odd / N == 1).
    n_splits = 2 if (n % 2 == 1 and nk % 2 == 0 and nk >= 2) else 1
    nk_inner = nk // n_splits

    # Pad only V's (tiny) column axis so the LHS row-tile slice stays in
    # bounds; A stays untouched in HBM (ragged tail masked in-kernel).
    hw_v = nk * tk
    if hw_v != hw:
        v_flat = jnp.pad(v_flat, ((0, 0), (0, 0), (0, hw_v - hw)))

    if small_vmem:
        n_buffers = 4 if nk_inner >= 4 else (3 if nk_inner >= 3 else 2)
    else:
        n_buffers = 3 if nk_inner >= 3 else 2

    vmem_limit = (n_buffers * tk * hw * a_itemsize   # A row-tile buffers
                  + 2 * c * hw_v * 4                 # V double buffer
                  + c * hw * 4                       # V@A accumulator scratch
                  + (4 << 20))                       # outputs + slack
    vmem_limit = int(min(max(vmem_limit, 32 << 20), vmem_ceiling))

    kernel = _make_kernel(c, hw, hw_v, tk, nk_inner, n_splits,
                          jnp.dtype(a.dtype), precision)

    cost = pl.CostEstimate(
        flops=2 * n * c * hw * hw + 2 * n * c * hw,
        transcendentals=4 * n * c * hw,
        bytes_accessed=(n * hw * hw * a_itemsize
                        + n_splits * n * c * hw_v * 4
                        + n_splits * n * (c + 1) * 128 * 4),
    )

    e_part, s_part = pl.pallas_call(
        kernel,
        out_shape=(
            jax.ShapeDtypeStruct((n_splits, n, c, 128), jnp.float32),  # partial per-channel diag
            jax.ShapeDtypeStruct((n_splits, n, 1, 128), jnp.float32),  # sparsity partial sum
        ),
        grid_spec=pltpu.PrefetchScalarGridSpec(
            num_scalar_prefetch=0,
            grid=(n_splits, n, nk_inner),
            in_specs=[
                pl.BlockSpec((1, c, hw_v), lambda s, b, k: (b, 0, 0)),
                _a_block_spec(tk, hw, nk_inner, n_buffers),
            ],
            out_specs=[
                pl.BlockSpec((1, 1, c, 128), lambda s, b, k: (s, b, 0, 0)),
                pl.BlockSpec((1, 1, 1, 128), lambda s, b, k: (s, b, 0, 0)),
            ],
            scratch_shapes=[pltpu.VMEM((c, hw), jnp.float32)],
        ),
        compiler_params=pltpu.CompilerParams(
            dimension_semantics=("parallel", "parallel", "arbitrary"),
            vmem_limit_bytes=vmem_limit,
        ),
        cost_estimate=cost,
    )(v_flat, a)

    diag = jnp.sum(e_part[..., 0], axis=0)           # (N, C): abs applies to the FULL diag
    e_loss = jnp.sum(jnp.abs(diag)) / (n * c)
    s_loss = jnp.sum(s_part[:, :, 0, 0]) / (n * c * h * w) - 1.0
    return e_loss, s_loss


def _reference(eigen_vectors, affinity_matrix):
    n, c, h, w = eigen_vectors.shape
    v = eigen_vectors.reshape(n, c, h * w).astype(jnp.float32)
    va = jnp.einsum("ncp,npq->ncq", v, affinity_matrix.astype(jnp.float32))
    diag = jnp.sum(va * v, axis=-1)                   # (n, c) == diag(V A V^T)
    e_loss = jnp.mean(jnp.abs(diag))
    s_loss = (jnp.sum(v ** 0.9) + jnp.sum((1.0 - v) ** 0.9)) / (n * c * h * w) - 1.0
    return e_loss, s_loss


if __name__ == "__main__":
    key = jax.random.PRNGKey(0)

    def check(n, c, h, w, a_dtype=jnp.float32, max_tk=None, rtol=2e-3, atol=2e-3):
        k1, k2 = jax.random.split(jax.random.fold_in(key, n * 10000 + c * 100 + h))
        hw = h * w
        # eigen_vectors in [0, 1] (soft segmentation maps) keeps v ** 0.9
        # well-defined, matching the PyTorch semantics.
        ev = jax.random.uniform(k1, (n, c, h, w), dtype=jnp.float32)
        am = jax.random.normal(k2, (n, hw, hw), dtype=jnp.float32).astype(a_dtype)
        e, s = our_loss(ev, am, max_tk=max_tk)
        jax.block_until_ready((e, s))
        e_r, s_r = _reference(ev, am)
        assert jnp.allclose(e, e_r, rtol=rtol, atol=atol), (n, c, h, w, a_dtype, e, e_r)
        assert jnp.allclose(s, s_r, rtol=1e-4, atol=1e-4), (n, c, h, w, a_dtype, s, s_r)

    # 1) Small aligned case: single full-extent A tile, f32 A.
    check(2, 4, 8, 8)
    # 2) bf16 A (halves the dominant HBM stream; V cast to bf16 only at the MXU LHS).
    check(2, 4, 8, 8, a_dtype=jnp.bfloat16, rtol=3e-2, atol=3e-2)
    # 3) Multiple contiguous row tiles + dual-TensorCore split path (N odd, nk even).
    check(1, 4, 16, 16, max_tk=128)
    # 4) Ragged HW (not a multiple of 128): A streamed unpadded, tail masked in-kernel,
    #    V column-padded, sparsity lane mask active.
    check(1, 3, 12, 12, max_tk=128)

    print("KERNEL_OK")
</pallas_src>

<mosaic_0001>
module attributes {stable_mosaic.version = 11 : i64} {
  func.func @kernel(%arg0: i32, %arg1: i32, %arg2: i32, %arg3: memref<1x4x64xf32, #tpu.memory_space<vmem>>, %arg4: memref<1x64x64xf32, #tpu.memory_space<vmem>>, %arg5: memref<1x1x4x128xf32, #tpu.memory_space<vmem>>, %arg6: memref<1x1x1x128xf32, #tpu.memory_space<vmem>>, %arg7: memref<4x64xf32, #tpu.memory_space<vmem>>) attributes {dimension_semantics = [#tpu.dimension_semantics<parallel>, #tpu.dimension_semantics<parallel>, #tpu.dimension_semantics<arbitrary>], iteration_bounds = array<i64: 1, 2, 1>, scalar_prefetch = 0 : i64, scratch_operands = 1 : i64, tpu.core_type = #tpu.core_type<tc>, window_params = [{transform_indices = @transform_0, window_bounds = array<i64: 1, 4, 64>}, {transform_indices = @transform_1, window_bounds = array<i64: 1, 64, 64>}, {transform_indices = @transform_2, window_bounds = array<i64: 1, 1, 4, 128>}, {transform_indices = @transform_3, window_bounds = array<i64: 1, 1, 1, 128>}]} {
    %c0_i32 = arith.constant 0 : i32
    %0 = arith.cmpi eq, %arg2, %c0_i32 : i32
    %1 = arith.extui %0 : i1 to i32
    %c0_i32_0 = arith.constant 0 : i32
    %2 = arith.cmpi ne, %1, %c0_i32_0 : i32
    scf.if %2 {
      %cst_15 = arith.constant 0.000000e+00 : f32
      %19 = vector.broadcast %cst_15 : f32 to vector<4x64xf32>
      %c0_16 = arith.constant 0 : index
      %c0_17 = arith.constant 0 : index
      %20 = vector.load %arg7[%c0_16, %c0_17] : memref<4x64xf32, #tpu.memory_space<vmem>>, vector<4x64xf32>
      tpu.vector_store %arg7[%c0_16, %c0_17], %19 {strides = array<i32>} : memref<4x64xf32, #tpu.memory_space<vmem>>, vector<4x64xf32>,
      %cst_18 = arith.constant 0.000000e+00 : f32
      %21 = vector.broadcast %cst_18 : f32 to vector<1x1x1x128xf32>
      %c0_19 = arith.constant 0 : index
      %c0_20 = arith.constant 0 : index
      %c0_21 = arith.constant 0 : index
      %c0_22 = arith.constant 0 : index
      %22 = vector.load %arg6[%c0_19, %c0_20, %c0_21, %c0_22] : memref<1x1x1x128xf32, #tpu.memory_space<vmem>>, vector<1x1x1x128xf32>
      tpu.vector_store %arg6[%c0_19, %c0_20, %c0_21, %c0_22], %21 {strides = array<i32>} : memref<1x1x1x128xf32, #tpu.memory_space<vmem>>, vector<1x1x1x128xf32>,
    } else {
    }
    %c0_i32_1 = arith.constant 0 : i32
    %3 = arith.cmpi eq, %arg2, %c0_i32_1 : i32
    %c0_i32_2 = arith.constant 0 : i32
    %4 = arith.cmpi eq, %arg0, %c0_i32_2 : i32
    %5 = arith.andi %3, %4 : i1
    %6 = arith.extui %5 : i1 to i32
    %c0_i32_3 = arith.constant 0 : i32
    %7 = arith.cmpi ne, %6, %c0_i32_3 : i32
    scf.if %7 {
      %c0_15 = arith.constant 0 : index
      %c0_16 = arith.constant 0 : index
      %c0_17 = arith.constant 0 : index
      %19 = vector.load %arg3[%c0_15, %c0_16, %c0_17] : memref<1x4x64xf32, #tpu.memory_space<vmem>>, vector<1x4x64xf32>
      %20 = vector.shape_cast %19 : vector<1x4x64xf32> to vector<4x64xf32>
      %cst_18 = arith.constant 0.899999976 : f32
      %21 = vector.broadcast %cst_18 : f32 to vector<4x64xf32>
      %22 = math.powf %20, %21 : vector<4x64xf32>
      %cst_19 = arith.constant 1.000000e+00 : f32
      %23 = vector.broadcast %cst_19 : f32 to vector<4x64xf32>
      %24 = arith.subf %23, %20 : vector<4x64xf32>
      %cst_20 = arith.constant 0.899999976 : f32
      %25 = vector.broadcast %cst_20 : f32 to vector<4x64xf32>
      %26 = math.powf %24, %25 : vector<4x64xf32>
      %27 = arith.addf %22, %26 : vector<4x64xf32>
      %28 = vector.shape_cast %27 : vector<4x64xf32> to vector<1x4x64xf32>
      %cst_21 = arith.constant dense<0.000000e+00> : vector<1xf32>
      %29 = vector.multi_reduction <add>, %28, %cst_21 [1, 2] : vector<1x4x64xf32> to vector<1xf32>
      %30 = vector.shape_cast %29 : vector<1xf32> to vector<1x1x1xf32>
      %31 = vector.extract %30[0, 0, 0] : f32 from vector<1x1x1xf32>
      %32 = vector.broadcast %31 : f32 to vector<1x1xf32>
      %33 = vector.shape_cast %32 : vector<1x1xf32> to vector<1x1x1x1xf32>
      %34 = vector.broadcast %33 : vector<1x1x1x1xf32> to vector<1x1x1x128xf32>
      %c0_22 = arith.constant 0 : index
      %c0_23 = arith.constant 0 : index
      %c0_24 = arith.constant 0 : index
      %c0_25 = arith.constant 0 : index
      %35 = vector.load %arg6[%c0_22, %c0_23, %c0_24, %c0_25] : memref<1x1x1x128xf32, #tpu.memory_space<vmem>>, vector<1x1x1x128xf32>
      tpu.vector_store %arg6[%c0_22, %c0_23, %c0_24, %c0_25], %34 {strides = array<i32>} : memref<1x1x1x128xf32, #tpu.memory_space<vmem>>, vector<1x1x1x128xf32>,
    } else {
    }
    %c0 = arith.constant 0 : index
    %c0_4 = arith.constant 0 : index
    %c0_5 = arith.constant 0 : index
    %8 = vector.load %arg4[%c0, %c0_4, %c0_5] : memref<1x64x64xf32, #tpu.memory_space<vmem>>, vector<1x64x64xf32>
    %9 = vector.shape_cast %8 : vector<1x64x64xf32> to vector<64x64xf32>
    %c0_6 = arith.constant 0 : index
    %c0_7 = arith.constant 0 : index
    %c0_8 = arith.constant 0 : index
    %10 = vector.load %arg3[%c0_6, %c0_7, %c0_8] : memref<1x4x64xf32, #tpu.memory_space<vmem>>, vector<1x4x64xf32>
    %11 = vector.shape_cast %10 : vector<1x4x64xf32> to vector<4x64xf32>
    %c0_9 = arith.constant 0 : index
    %c0_10 = arith.constant 0 : index
    %12 = vector.load %arg7[%c0_9, %c0_10] : memref<4x64xf32, #tpu.memory_space<vmem>>, vector<4x64xf32>
    %cst = arith.constant dense<0.000000e+00> : vector<4x64xf32>
    %13 = tpu.matmul %11, %9, %cst {dimension_numbers = #tpu.dot_dimension_numbers<[1], [0], [0], [1], [0, 0, 1, 1], [], []>} : vector<4x64xf32>, vector<64x64xf32>, vector<4x64xf32> -> vector<4x64xf32>
    %14 = arith.addf %12, %13 : vector<4x64xf32>
    %c0_11 = arith.constant 0 : index
    %c0_12 = arith.constant 0 : index
    %15 = vector.load %arg7[%c0_11, %c0_12] : memref<4x64xf32, #tpu.memory_space<vmem>>, vector<4x64xf32>
    tpu.vector_store %arg7[%c0_11, %c0_12], %14 {strides = array<i32>} : memref<4x64xf32, #tpu.memory_space<vmem>>, vector<4x64xf32>,
    %c0_i32_13 = arith.constant 0 : i32
    %16 = arith.cmpi eq, %arg2, %c0_i32_13 : i32
    %17 = arith.extui %16 : i1 to i32
    %c0_i32_14 = arith.constant 0 : i32
    %18 = arith.cmpi ne, %17, %c0_i32_14 : i32
    scf.if %18 {
      %c0_15 = arith.constant 0 : index
      %c0_16 = arith.constant 0 : index
      %c0_17 = arith.constant 0 : index
      %19 = vector.load %arg3[%c0_15, %c0_16, %c0_17] : memref<1x4x64xf32, #tpu.memory_space<vmem>>, vector<1x4x64xf32>
      %20 = vector.shape_cast %19 : vector<1x4x64xf32> to vector<4x64xf32>
      %c0_18 = arith.constant 0 : index
      %c0_19 = arith.constant 0 : index
      %21 = vector.load %arg7[%c0_18, %c0_19] : memref<4x64xf32, #tpu.memory_space<vmem>>, vector<4x64xf32>
      %22 = arith.mulf %21, %20 : vector<4x64xf32>
      %cst_20 = arith.constant dense<0.000000e+00> : vector<4xf32>
      %23 = vector.multi_reduction <add>, %22, %cst_20 [1] : vector<4x64xf32> to vector<4xf32>
      %24 = vector.shape_cast %23 : vector<4xf32> to vector<4x1xf32>
      %25 = vector.shape_cast %24 : vector<4x1xf32> to vector<1x1x4x1xf32>
      %26 = vector.shape_cast %25 : vector<1x1x4x1xf32> to vector<1x1x4x1xf32>
      %27 = vector.broadcast %26 : vector<1x1x4x1xf32> to vector<1x1x4x128xf32>
      %c0_21 = arith.constant 0 : index
      %c0_22 = arith.constant 0 : index
      %c0_23 = arith.constant 0 : index
      %c0_24 = arith.constant 0 : index
      %28 = vector.load %arg5[%c0_21, %c0_22, %c0_23, %c0_24] : memref<1x1x4x128xf32, #tpu.memory_space<vmem>>, vector<1x1x4x128xf32>
      tpu.vector_store %arg5[%c0_21, %c0_22, %c0_23, %c0_24], %27 {strides = array<i32>} : memref<1x1x4x128xf32, #tpu.memory_space<vmem>>, vector<1x1x4x128xf32>,
    } else {
    }
    return
  }
  func.func @transform_0(%arg0: i32, %arg1: i32, %arg2: i32) -> (i32, i32, i32) {
    %c0_i32 = arith.constant 0 : i32
    %c0_i32_0 = arith.constant 0 : i32
    %c0_i32_1 = arith.constant 0 : i32
    return %arg1, %c0_i32, %c0_i32_0 : i32, i32, i32
  }
  func.func @transform_1(%arg0: i32, %arg1: i32, %arg2: i32) -> (i32, i32, i32) {
    %c1_i32 = arith.constant 1 : i32
    %0 = arith.muli %arg0, %c1_i32 : i32
    %1 = arith.addi %0, %arg2 : i32
    %c0_i32 = arith.constant 0 : i32
    %c0_i32_0 = arith.constant 0 : i32
    return %arg1, %1, %c0_i32 : i32, i32, i32
  }
  func.func @transform_2(%arg0: i32, %arg1: i32, %arg2: i32) -> (i32, i32, i32, i32) {
    %c0_i32 = arith.constant 0 : i32
    %c0_i32_0 = arith.constant 0 : i32
    %c0_i32_1 = arith.constant 0 : i32
    return %arg0, %arg1, %c0_i32, %c0_i32_0 : i32, i32, i32, i32
  }
  func.func @transform_3(%arg0: i32, %arg1: i32, %arg2: i32) -> (i32, i32, i32, i32) {
    %c0_i32 = arith.constant 0 : i32
    %c0_i32_0 = arith.constant 0 : i32
    %c0_i32_1 = arith.constant 0 : i32
    return %arg0, %arg1, %c0_i32, %c0_i32_0 : i32, i32, i32, i32
  }
}

</mosaic_0001>

<llo_original>
// kernel: tpu_custom_call.1
$region0: #{tpu_custom_call.1}
  #allocation0 [shape = 'u32[]', space=smem, size = 0x4, offset = 0x4, fixed_abs, tag = 'smem constant byte address 0x4 - core index']
  #allocation1 [shape = 'u32[72,128]{1,0:T(1,128)}', space=vmem, size = 0x9000, scoped, tag = 'internal scratch']
  #allocation2 [shape = 'f32[4,64]{1,0:T(4,128)}', space=vmem, size = 0x800, scoped, tag = 'scratch operand']
  %s0 = inlined_call_operand.hbm [shape: f32[2,4,64], index: 0, kind: input, shape index: {}]
  %s1 = inlined_call_operand.hbm [shape: f32[2,64,64], index: 1, kind: input, shape index: {}]
  %s2 = inlined_call_operand.hbm [shape: f32[1,2,4,128], index: 2, kind: output, shape index: {0}]
  %s3 = inlined_call_operand.hbm [shape: f32[1,2,1,128], index: 3, kind: output, shape index: {1}]
  %4 = xla_tuple %s2, %s3
  %s5 = sld [smem:[#allocation0]]
  $region69: #{tpu_custom_call.1} parent=0
    _
  %s7 = ssub.s32 1, %s5
  %s8 = scalar_select 0, %s7, %s5
  $region1: #{tpu_custom_call.1} parent=0
    #allocation3 [shape = 'u8[4096]{0}', space=vmem, size = 0x1000, scoped, tag = 'input window, operand 0']
    #allocation4 [shape = 's32[2]{0}', space=sflag, size = 0x8, scoped, tag = 'scoped memory for tpu_custom_call.1']
    #allocation5 [shape = 's32[2]{0}', space=sflag, size = 0x8, scoped, tag = 'scoped memory for tpu_custom_call.1']
    #allocation6 [shape = 'u8[65536]{0}', space=vmem, size = 0x10000, scoped, tag = 'input window, operand 1']
    #allocation7 [shape = 's32[2]{0}', space=sflag, size = 0x8, scoped, tag = 'scoped memory for tpu_custom_call.1']
    #allocation8 [shape = 'u8[4096]{0}', space=vmem, size = 0x1000, scoped, tag = 'output window, operand 0']
    #allocation9 [shape = 'u8[1024]{0}', space=vmem, size = 0x400, scoped, tag = 'output window, operand 1']
    #allocation10 [shape = 's32[2]{0}', space=sflag, size = 0x8, scoped, tag = 'scoped memory for tpu_custom_call.1']
    %9 = vsyncpa [#allocation4], 0
    %s10 = scalar_lea.sflag [#allocation4], 1
    %11 = vsyncpa %s10, 0
    %12 = vsyncpa [#allocation7], 0
    %s13 = scalar_lea.sflag [#allocation7], 1
    %14 = vsyncpa %s13, 0
    %15 = vsyncpa [#allocation5], 0
    %s16 = scalar_lea.sflag [#allocation5], 1
    %17 = vsyncpa %s16, 0
    %18 = vsyncpa [#allocation10], 0
    %s19 = scalar_lea.sflag [#allocation10], 1
    %20 = vsyncpa %s19, 0
    loop: start=0, step=1, limit=4
    $region2: #{tpu_custom_call.1} parent=1 // loop_pre_header
      _
    $region3: #{tpu_custom_call.1} parent=1 // loop_header
      %s22 = sphi 0, %s26
      %p23 = scmp.ge.s32.totalorder %s22, 4
      %s29 = sphi 0, %s48
      %s30 = sphi 0, %s44
      %s31 = sphi 0, %s40
      %s32 = sphi 0, %s29
      %s33 = sphi 0, %s30
      %s34 = sphi 0, %s31
      %s35 = sphi 0, %s32
      %s36 = sphi 0, %s33
      %s37 = sphi 0, %s34
      %s51 = sphi 0, %s53
      %s54 = sphi 0, %s51
      %s55 = sphi 0, %s54
      %s71 = sphi 0, %s55
      %s81 = sphi 0, %s83
      %s84 = sphi 0, %s81
      %s85 = sphi 0, %s84
      %s101 = sphi 0, %s85
      %s109 = sphi 0, %s111
      %s112 = sphi 0, %s109
      %s113 = sphi 0, %s112
      %s129 = sphi 0, %s113
      %s137 = sphi 0, %s139
      %s140 = sphi 0, %s137
      %s141 = sphi 0, %s140
      %s157 = sphi 0, %s141
    $region4: #{tpu_custom_call.1} parent=1 // loop_header_branch
      %25 = sbr.rel (%p23) target = $region8
    $region5: #{tpu_custom_call.1} parent=1 // loop_body
      %s27 = ssub.s32 %s22, 1
      %s28 = ssub.s32 %s22, 2
      %s38 = sadd.s32 1, %s31
      %p39 = scmp.ge.s32.totalorder %s38, 1
      %s40 = scalar_select %p39, 0, %s38
      %s41 = sadd.s32 1, %s30
      %s42 = scalar_select %p39, %s41, %s30
      %p43 = scmp.ge.s32.totalorder %s42, 2
      %s44 = scalar_select %p43, 0, %s42
      %s45 = sadd.s32 1, %s29
      %s46 = scalar_select %p43, %s45, %s29
      %p47 = scmp.ge.s32.totalorder %s46, 1
      %s48 = scalar_select %p47, 0, %s46
      %s49 = ssub.s32 %s30, %s44
      %p50 = scmp.eq.s32.totalorder %s49, 0
      %s52 = sadd.s32 %s51, 1
      %s53 = scalar_select %p50, %s51, %s52
      %p56 = pneg %p50
      %p57 = scmp.eq.s32.totalorder %s22, 1
      %p58 = por %p56, %p57
      %p59 = scmp.ne.s32.totalorder %s51, %s54
      %p60 = scmp.eq.s32.totalorder %s22, 0
      %p61 = por %p59, %p60
      %p62 = scmp.ne.s32.totalorder %s51, %s54
      %p63 = scmp.eq.s32.totalorder %s27, 1
      %p64 = por %p62, %p63
      %p65 = scmp.ne.s32.totalorder %s54, %s55
      %p66 = scmp.eq.s32.totalorder %s27, 0
      %p67 = por %p65, %p66
      %p68 = scmp.ne.s32.totalorder %s54, %s55
      %p69 = scmp.eq.s32.totalorder %s28, 1
      %p70 = por %p68, %p69
      %p72 = scmp.ne.s32.totalorder %s55, %s71
      %p73 = scmp.eq.s32.totalorder %s28, 0
      %p74 = por %p72, %p73
      %s75 = sadd.s32 %s29, %s31
      %s76 = sadd.s32 %s48, %s40
      %s77 = ssub.s32 %s30, %s44
      %s78 = ssub.s32 %s75, %s76
      %s79 = sor.u32 %s77, %s78
      %p80 = scmp.eq.s32.totalorder %s79, 0
      %s82 = sadd.s32 %s81, 1
      %s83 = scalar_select %p80, %s81, %s82
      %p86 = pneg %p80
      %p87 = scmp.eq.s32.totalorder %s22, 1
      %p88 = por %p86, %p87
      %p89 = scmp.ne.s32.totalorder %s81, %s84
      %p90 = scmp.eq.s32.totalorder %s22, 0
      %p91 = por %p89, %p90
      %p92 = scmp.ne.s32.totalorder %s81, %s84
      %p93 = scmp.eq.s32.totalorder %s27, 1
      %p94 = por %p92, %p93
      %p95 = scmp.ne.s32.totalorder %s84, %s85
      %p96 = scmp.eq.s32.totalorder %s27, 0
      %p97 = por %p95, %p96
      %p98 = scmp.ne.s32.totalorder %s84, %s85
      %p99 = scmp.eq.s32.totalorder %s28, 1
      %p100 = por %p98, %p99
      %p102 = scmp.ne.s32.totalorder %s85, %s101
      %p103 = scmp.eq.s32.totalorder %s28, 0
      %p104 = por %p102, %p103
      %s105 = ssub.s32 %s29, %s48
      %s106 = ssub.s32 %s30, %s44
      %s107 = sor.u32 %s105, %s106
      %p108 = scmp.eq.s32.totalorder %s107, 0
      %s110 = sadd.s32 %s109, 1
      %s111 = scalar_select %p108, %s109, %s110
      %p114 = pneg %p108
      %p115 = scmp.eq.s32.totalorder %s22, 1
      %p116 = por %p114, %p115
      %p117 = scmp.ne.s32.totalorder %s109, %s112
      %p118 = scmp.eq.s32.totalorder %s22, 0
      %p119 = por %p117, %p118
      %p120 = scmp.ne.s32.totalorder %s109, %s112
      %p121 = scmp.eq.s32.totalorder %s27, 1
      %p122 = por %p120, %p121
      %p123 = scmp.ne.s32.totalorder %s112, %s113
      %p124 = scmp.eq.s32.totalorder %s27, 0
      %p125 = por %p123, %p124
      %p126 = scmp.ne.s32.totalorder %s112, %s113
      %p127 = scmp.eq.s32.totalorder %s28, 1
      %p128 = por %p126, %p127
      %p130 = scmp.ne.s32.totalorder %s113, %s129
      %p131 = scmp.eq.s32.totalorder %s28, 0
      %p132 = por %p130, %p131
      %s133 = ssub.s32 %s29, %s48
      %s134 = ssub.s32 %s30, %s44
      %s135 = sor.u32 %s133, %s134
      %p136 = scmp.eq.s32.totalorder %s135, 0
      %s138 = sadd.s32 %s137, 1
      %s139 = scalar_select %p136, %s137, %s138
      %p142 = pneg %p136
      %p143 = scmp.eq.s32.totalorder %s22, 1
      %p144 = por %p142, %p143
      %p145 = scmp.ne.s32.totalorder %s137, %s140
      %p146 = scmp.eq.s32.totalorder %s22, 0
      %p147 = por %p145, %p146
      %p148 = scmp.ne.s32.totalorder %s137, %s140
      %p149 = scmp.eq.s32.totalorder %s27, 1
      %p150 = por %p148, %p149
      %p151 = scmp.ne.s32.totalorder %s140, %s141
      %p152 = scmp.eq.s32.totalorder %s27, 0
      %p153 = por %p151, %p152
      %p154 = scmp.ne.s32.totalorder %s140, %s141
      %p155 = scmp.eq.s32.totalorder %s28, 1
      %p156 = por %p154, %p155
      %p158 = scmp.ne.s32.totalorder %s141, %s157
      %p159 = scmp.eq.s32.totalorder %s28, 0
      %p160 = por %p158, %p159
      %p161 = scmp.le.s32.totalorder 1, %s22
      %p162 = scmp.lt.s32.totalorder %s22, 3
      %p163 = pnand %p161, %p162
      %p164 = pneg %p163
      // Predicated region
      $region9: #{tpu_custom_call.1} parent=5 // pred_check
        _
      $region10: #{tpu_custom_call.1} parent=5 // pred_check_branch
        %166 = sbr.rel (%p163) target = $region12
      $region11: #{tpu_custom_call.1} parent=5 // pred_region
        %s167 = ssub.s32 %s22, 1
      $region12: #{tpu_custom_call.1} parent=5 // pred_fallthru
        _
      %p168 = scmp.lt.s32.totalorder %s22, 2
      // Predicated region
      $region13: #{tpu_custom_call.1} parent=5 // pred_check
        %p169 = pneg %p168
      $region14: #{tpu_custom_call.1} parent=5 // pred_check_branch
        %171 = sbr.rel (%p169) target = $region16
      $region15: #{tpu_custom_call.1} parent=5 // pred_region
        // Predicated region
        $region17: #{tpu_custom_call.1} parent=15 // pred_check
          %p172 = pneg %p61
        $region18: #{tpu_custom_call.1} parent=15 // pred_check_branch
          %174 = sbr.rel (%p172) target = $region20
        $region19: #{tpu_custom_call.1} parent=15 // pred_region
          %s175 = sand.u32 %s51, 1
          %s176 = scalar_lea.sflag [#allocation4], %s175
          %s177 = sand.u32 %s51, 1
          %s178 = smul.addr %s177, 4
          %s179 = scalar_lea.vmem [#allocation3], %s178
          %181 = vsyncadd %s176, 0
          %s182 = smul.addr %s30, 4
          %s183 = scalar_lea.hbm %s0, %s182
          %s185 = sshll.u32 %s183, 4
          %s186 = int_to_ptr.hbm [resolvable:$true] %s185
          %s187 = sshll.u32 %s179, 4
          %s188 = int_to_ptr.vmem [resolvable:$true] %s187
          %190 = dma.hbm_to_vmem [thread:$0]  %s186, 64, %s188, %s176
        $region20: #{tpu_custom_call.1} parent=15 // pred_fallthru
          _
        // Predicated region
        $region21: #{tpu_custom_call.1} parent=15 // pred_check
          %p191 = pneg %p91
        $region22: #{tpu_custom_call.1} parent=15 // pred_check_branch
          %193 = sbr.rel (%p191) target = $region24
        $region23: #{tpu_custom_call.1} parent=15 // pred_region
          %s194 = sand.u32 %s81, 1
          %s195 = scalar_lea.sflag [#allocation7], %s194
          %s196 = sand.u32 %s81, 1
          %s197 = smul.addr %s196, 64
          %s198 = scalar_lea.vmem [#allocation6], %s197
          %s199 = sadd.s32 %s29, %s31
          %s200 = smul.u32 8, %s199
          %202 = vsyncadd %s195, 0
          %s203 = smul.addr %s30, 8
          %s204 = sadd.s32 %s200, %s203
          %s205 = smul.addr %s204, 8
          %s206 = scalar_lea.hbm %s1, %s205
          %s207 = sshll.u32 %s206, 4
          %s208 = int_to_ptr.hbm [resolvable:$true] %s207
          %s209 = sshll.u32 %s198, 4
          %s210 = int_to_ptr.vmem [resolvable:$true] %s209
          %215 = dma.hbm_to_vmem [thread:$0]  %s208, 1024, %s210, %s195, 128, 128, 8
        $region24: #{tpu_custom_call.1} parent=15 // pred_fallthru
          _
      $region16: #{tpu_custom_call.1} parent=5 // pred_fallthru
        _
      %p216 = scmp.le.s32.totalorder 1, %s22
      %p217 = scmp.lt.s32.totalorder %s22, 3
      %p218 = pnand %p216, %p217
      %p219 = pneg %p218
      // Predicated region
      $region25: #{tpu_custom_call.1} parent=5 // pred_check
        _
      $region26: #{tpu_custom_call.1} parent=5 // pred_check_branch
        %221 = sbr.rel (%p218) target = $region28
      $region27: #{tpu_custom_call.1} parent=5 // pred_region
        %s222 = ssub.s32 %s22, 1
        %s223 = sand.u32 %s54, 1
        %s224 = scalar_lea.sflag [#allocation4], %s223
        %s225 = sand.u32 %s54, 1
        %s226 = smul.addr %s225, 4
        %s227 = scalar_lea.vmem [#allocation3], %s226
        // Predicated region
        $region29: #{tpu_custom_call.1} parent=27 // pred_check
          %p228 = pneg %p67
        $region30: #{tpu_custom_call.1} parent=27 // pred_check_branch
          %230 = sbr.rel (%p228) target = $region32
        $region31: #{tpu_custom_call.1} parent=27 // pred_region
          %232 = dma.done %s224, 64
        $region32: #{tpu_custom_call.1} parent=27 // pred_fallthru
          _
        %s233 = sand.u32 %s84, 1
        %s234 = scalar_lea.sflag [#allocation7], %s233
        %s235 = sand.u32 %s84, 1
        %s236 = smul.addr %s235, 64
        %s237 = scalar_lea.vmem [#allocation6], %s236
        // Predicated region
        $region33: #{tpu_custom_call.1} parent=27 // pred_check
          %p238 = pneg %p97
        $region34: #{tpu_custom_call.1} parent=27 // pred_check_branch
          %240 = sbr.rel (%p238) target = $region36
        $region35: #{tpu_custom_call.1} parent=27 // pred_region
          %242 = dma.done %s234, 1024
        $region36: #{tpu_custom_call.1} parent=27 // pred_fallthru
          _
        %s243 = sand.u32 %s54, 1
        %s244 = scalar_lea.sflag [#allocation4], %s243
        %s245 = sand.u32 %s54, 1
        %s246 = smul.addr %s245, 4
        %s247 = scalar_lea.vmem [#allocation3], %s246
        %p248 = pneg %p67
        %p249 = pneg %p64
        %s250 = sand.u32 %s84, 1
        %s251 = scalar_lea.sflag [#allocation7], %s250
        %s252 = sand.u32 %s84, 1
        %s253 = smul.addr %s252, 64
        %s254 = scalar_lea.vmem [#allocation6], %s253
        %p255 = pneg %p97
        %p256 = pneg %p94
        %p257 = pneg %p125
        %p258 = pneg %p122
        %s259 = sand.u32 %s112, 1
        %s260 = scalar_lea.sflag [#allocation5], %s259
        %s261 = sand.u32 %s112, 1
        %s262 = smul.addr %s261, 4
        %s263 = scalar_lea.vmem [#allocation8], %s262
        %p264 = pneg %p153
        %p265 = pneg %p150
        %s266 = sand.u32 %s140, 1
        %s267 = scalar_lea.sflag [#allocation10], %s266
        %s268 = sand.u32 %s140, 1
        %s269 = scalar_lea.vmem [#allocation9], %s268
        %s270 = sadd.s32 %s32, %s34
        %s271 = smul.u32 8, %s270
        %p272 = scmp.eq.s32.totalorder %s34, 0
        // Predicated region
        $region37: #{tpu_custom_call.1} parent=27 // pred_check
          %p273 = pneg %p272
        $region38: #{tpu_custom_call.1} parent=27 // pred_check_branch
          %275 = sbr.rel (%p273) target = $region40
        $region39: #{tpu_custom_call.1} parent=27 // pred_region
          %vm276 = vcmask 519168
          %277 = vst.msk [vmem:[#allocation2] sm:$0xf] %vm276, 0.0
          %278 = vst [vmem:[%s269] sm:$0x1] 0.0
        $region40: #{tpu_custom_call.1} parent=27 // pred_fallthru
          _
        %p279 = scmp.eq.s32.totalorder %s32, 0
        %p280 = pnand %p272, %p279
        %p281 = pneg %p280
        // Predicated region
        $region41: #{tpu_custom_call.1} parent=27 // pred_check
          _
        $region42: #{tpu_custom_call.1} parent=27 // pred_check_branch
          %283 = sbr.rel (%p280) target = $region44
        $region43: #{tpu_custom_call.1} parent=27 // pred_region
          %v284 = vld [vmem:[%s227] sm:$0xf]
          %v285 = vpow.f32 %v284, 0.9
          %v286 = vsub.f32 1.0, %v284
          %v287 = vpow.f32 %v286, 0.9
          %v288 = vadd.f32 %v285, %v287
          %vm289 = vcmask 519168
          %v290 = vsel %vm289, %v288, 0.0
          %291 = vadd.xlane.f32.xlu0 %v290
          %v292 = vpop.xlane.xlu0 %291
          %v293 = vrot.slane %v292, 4
          %v294 = vadd.f32 %v292, %v293
          %v295 = vrot.slane %v294, 2
          %v296 = vadd.f32 %v294, %v295
          %v297 = vrot.slane %v296, 1
          %v298 = vadd.f32 %v296, %v297
          %s299 = vtos %v298
          %v300 = vstv %s299
          %301 = vst [vmem:[%s269] sm:$0x1] %v300
        $region44: #{tpu_custom_call.1} parent=27 // pred_fallthru
          _
        %v302 = vld [vmem:[%s237] sm:$0xff]
        %v303 = vld [vmem:[%s237 + $0x8] sm:$0xff]
        %v304 = vld [vmem:[%s237 + $0x10] sm:$0xff]
        %v305 = vld [vmem:[%s237 + $0x18] sm:$0xff]
        %v306 = vld [vmem:[%s237 + $0x20] sm:$0xff]
        %v307 = vld [vmem:[%s237 + $0x28] sm:$0xff]
        %v308 = vld [vmem:[%s237 + $0x30] sm:$0xff]
        %v309 = vld [vmem:[%s237 + $0x38] sm:$0xff]
        %v310 = vld [vmem:[%s227] sm:$0xf]
        %v311 = vld [vmem:[#allocation2] sm:$0xf]
        %vm312 = vcmask 523264
        %v314 = vsel %vm312, %v310, 0
        %316 = vmatpush.msra.mxu0 0.0
        %317 = vmatpush.msra.mxu0 0.0
        %318 = vmatpush.msra.mxu0 0.0
        %319 = vmatpush.msra.mxu0 0.0
        %320 = vmatpush.msra.mxu0 0.0
        %321 = vmatpush.msra.mxu0 0.0
        %322 = vmatpush.msra.mxu0 0.0
        %323 = vmatpush.msra.mxu0 0.0
        %324 = vmatpush.msra.mxu0 %v309
        %325 = vmatpush.msra.mxu0 %v308
        %326 = vmatpush.msra.mxu0 %v307
        %327 = vmatpush.msra.mxu0 %v306
        %328 = vmatpush.msra.mxu0 %v305
        %329 = vmatpush.msra.mxu0 %v304
        %330 = vmatpush.msra.mxu0 %v303
        %331 = vmatpush.msra.mxu0 %v302
        %332 = vmatmul.f32.gmra.mxu0 %v314
        %v333 = vpop.f32.mrf.mxu0
        %v334 = vadd.f32 0.0, %v333
        %335 = vdwg.mxu0
        %v336 = vadd.f32 %v311, %v334
        %vm337 = vcmask 519168
        %338 = vst.msk [vmem:[#allocation2] sm:$0xf] %vm337, %v336
        // Predicated region
        $region45: #{tpu_custom_call.1} parent=27 // pred_check
          %p339 = pneg %p272
        $region46: #{tpu_custom_call.1} parent=27 // pred_check_branch
          %341 = sbr.rel (%p339) target = $region48
        $region47: #{tpu_custom_call.1} parent=27 // pred_region
          %v342 = vld [vmem:[%s227] sm:$0xf]
          %v343 = vld [vmem:[#allocation2] sm:$0xf]
          %v344 = vmul.f32 %v343, %v342
          %v345 = vsel %vm337, %v344, 0.0
          %346 = vadd.xlane.f32.xlu0 %v345
          %v347 = vpop.xlane.xlu0 %346
          %348 = vst [vmem:[%s263] sm:$0xf] %v347
        $region48: #{tpu_custom_call.1} parent=27 // pred_fallthru
          _
        %s349 = sand.u32 %s112, 1
        %s350 = scalar_lea.sflag [#allocation5], %s349
        %s351 = sand.u32 %s112, 1
        %s352 = smul.addr %s351, 4
        %s353 = scalar_lea.vmem [#allocation8], %s352
        %s354 = sand.u32 %s140, 1
        %s355 = scalar_lea.sflag [#allocation10], %s354
        %s356 = sand.u32 %s140, 1
        %s357 = scalar_lea.vmem [#allocation9], %s356
        // Predicated region
        $region49: #{tpu_custom_call.1} parent=27 // pred_check
          %p358 = pneg %p122
        $region50: #{tpu_custom_call.1} parent=27 // pred_check_branch
          %360 = sbr.rel (%p358) target = $region52
        $region51: #{tpu_custom_call.1} parent=27 // pred_region
          %362 = vsyncadd %s350, 0
          %s363 = smul.addr %s32, 2
          %s364 = sadd.s32 %s33, %s363
          %s365 = smul.addr %s364, 4
          %s366 = scalar_lea.hbm %s2, %s365
          %s368 = sshll.u32 %s353, 4
          %s369 = int_to_ptr.vmem [resolvable:$true] %s368
          %s370 = sshll.u32 %s366, 4
          %s371 = int_to_ptr.hbm [resolvable:$true] %s370
          %373 = dma.vmem_to_hbm [thread:$0]  %s369, 64, %s371, %s350
        $region52: #{tpu_custom_call.1} parent=27 // pred_fallthru
          _
        // Predicated region
        $region53: #{tpu_custom_call.1} parent=27 // pred_check
          %p374 = pneg %p150
        $region54: #{tpu_custom_call.1} parent=27 // pred_check_branch
          %376 = sbr.rel (%p374) target = $region56
        $region55: #{tpu_custom_call.1} parent=27 // pred_region
          %378 = vsyncadd %s355, 0
          %s379 = smul.addr %s32, 2
          %s380 = sadd.s32 %s33, %s379
          %s381 = scalar_lea.hbm %s3, %s380
          %s383 = sshll.u32 %s357, 4
          %s384 = int_to_ptr.vmem [resolvable:$true] %s383
          %s385 = sshll.u32 %s381, 4
          %s386 = int_to_ptr.hbm [resolvable:$true] %s385
          %388 = dma.vmem_to_hbm [thread:$0]  %s384, 16, %s386, %s355
        $region56: #{tpu_custom_call.1} parent=27 // pred_fallthru
          _
      $region28: #{tpu_custom_call.1} parent=5 // pred_fallthru
        _
      %p389 = scmp.le.s32.totalorder 2, %s22
      // Predicated region
      $region57: #{tpu_custom_call.1} parent=5 // pred_check
        %p390 = pneg %p389
      $region58: #{tpu_custom_call.1} parent=5 // pred_check_branch
        %392 = sbr.rel (%p390) target = $region60
      $region59: #{tpu_custom_call.1} parent=5 // pred_region
        %s393 = ssub.s32 %s22, 2
        // Predicated region
        $region61: #{tpu_custom_call.1} parent=59 // pred_check
          %p394 = pneg %p128
        $region62: #{tpu_custom_call.1} parent=59 // pred_check_branch
          %396 = sbr.rel (%p394) target = $region64
        $region63: #{tpu_custom_call.1} parent=59 // pred_region
          %s397 = sand.u32 %s113, 1
          %s398 = scalar_lea.sflag [#allocation5], %s397
          %s399 = sand.u32 %s113, 1
          %s400 = smul.addr %s399, 4
          %s401 = scalar_lea.vmem [#allocation8], %s400
          %403 = dma.done %s398, 64
        $region64: #{tpu_custom_call.1} parent=59 // pred_fallthru
          _
        // Predicated region
        $region65: #{tpu_custom_call.1} parent=59 // pred_check
          %p404 = pneg %p156
        $region66: #{tpu_custom_call.1} parent=59 // pred_check_branch
          %406 = sbr.rel (%p404) target = $region68
        $region67: #{tpu_custom_call.1} parent=59 // pred_region
          %s407 = sand.u32 %s141, 1
          %s408 = scalar_lea.sflag [#allocation10], %s407
          %s409 = sand.u32 %s141, 1
          %s410 = scalar_lea.vmem [#allocation9], %s409
          %412 = dma.done %s408, 16
        $region68: #{tpu_custom_call.1} parent=59 // pred_fallthru
          _
      $region60: #{tpu_custom_call.1} parent=5 // pred_fallthru
        _
    $region6: #{tpu_custom_call.1} parent=1 // loop_footer
      %s26 = sadd.s32 1, %s22
    $region7: #{tpu_custom_call.1} parent=1 // loop_footer_branch
      %21 = sbr.rel target = $region3
    $region8: #{tpu_custom_call.1} parent=1 // loop_exit
      _
    %413 = vsyncpa [#allocation4], 1
    %s414 = scalar_lea.sflag [#allocation4], 1
    %415 = vsyncpa %s414, 1
    %416 = vsyncpa [#allocation7], 1
    %s417 = scalar_lea.sflag [#allocation7], 1
    %418 = vsyncpa %s417, 1
    %419 = vsyncpa [#allocation5], 1
    %s420 = scalar_lea.sflag [#allocation5], 1
    %421 = vsyncpa %s420, 1
    %422 = vsyncpa [#allocation10], 1
    %s423 = scalar_lea.sflag [#allocation10], 1
    %424 = vsyncpa %s423, 1

</llo_original>
